<compile_context>
chip_gen: v7x
topology: tpu7x:2x2x1
jax: 0.10.0
libtpu: 0.0.40
codegen_flags: <defaults>
</compile_context>

<pallas_src>
import functools

import jax
import jax.numpy as jnp
import numpy as np
from jax import lax
from jax.experimental import pallas as pl
from jax.experimental.pallas import tpu as pltpu

_LANES = 128
_SUBLANES = 8
_EPS = 1e-09


def _int_pow(x, k):
    """x ** k for a static positive int k via multiplies (no EUP exp/log)."""
    assert k >= 1
    result = None
    base = x
    while k:
        if k & 1:
            result = base if result is None else result * base
        k >>= 1
        if k:
            base = base * base
    return result


def _static_pow(x, e):
    """x ** e for a static float e; small-integer e avoids transcendentals."""
    ei = int(round(e))
    if abs(e - ei) < 1e-12 and 1 <= ei <= 8:
        return _int_pow(x, ei)
    return jnp.power(x, e)


def _recip(x):
    """1/x via EUP approx reciprocal + one Newton step (frees the VALU slot)."""
    r = pl.reciprocal(x, approx=True)
    return r * (2.0 - x * r)


def _recip_pow(d, q):
    """1 / d**q for static q > 0, specialised for (half-)integer q."""
    k2 = 2.0 * q
    k2i = int(round(k2))
    if abs(k2 - k2i) < 1e-12 and 1 <= k2i <= 16:
        if k2i % 2 == 0:                       # integer q: recip(d)^q
            return _int_pow(_recip(d), k2i // 2)
        return _int_pow(lax.rsqrt(d), k2i)     # half-integer q: rsqrt(d)^(2q)
    return _recip(jnp.power(d, q))             # general q (exp/log on EUP)


def _corr_loss_kernel(i_ref, b_ref, u_ref, loss_ref, num_ref, den_ref, v_ref,
                      *, p, q, C, R, RC, n_chunks, S, need_mask, unroll):
    phase = pl.program_id(0)
    n = pl.program_id(1)
    t = pl.program_id(2)
    first = jnp.logical_and(n == 0, t == 0)

    # ---- phase 0: per-class lane-wise partial sums for the class centers ----
    @pl.when(jnp.logical_and(phase == 0, first))
    def _init_centers():
        num_ref[...] = jnp.zeros_like(num_ref)
        den_ref[...] = jnp.zeros_like(den_ref)

    @pl.when(phase == 0)
    def _centers():
        def chunk(c, carry):
            num_acc, den_acc = carry
            r0 = c * RC if n_chunks == 1 else pl.multiple_of(c * RC, RC)
            Ic = i_ref[pl.ds(r0, RC), :]               # (RC, 128)
            Bc = b_ref[pl.ds(r0, RC), :]               # (RC, 128)
            Uc = u_ref[:, pl.ds(r0, RC), :]            # (C, RC, 128)
            up = _static_pow(Uc, p)                    # padded u == 0 -> 0
            num_acc = num_acc + jnp.sum((Ic * Bc)[None] * up, axis=1)
            den_acc = den_acc + jnp.sum((Bc * Bc)[None] * up, axis=1)
            return num_acc, den_acc

        zero = jnp.zeros((C, _LANES), jnp.float32)
        if n_chunks == 1:
            num_acc, den_acc = chunk(0, (zero, zero))
        else:
            num_acc, den_acc = lax.fori_loop(0, n_chunks, chunk, (zero, zero),
                                             unroll=unroll)
        num_ref[...] += num_acc
        den_ref[...] += den_acc

    # ---- phase boundary: v = num/(den+eps), lane-broadcast to (C,128) -------
    @pl.when(jnp.logical_and(phase == 1, first))
    def _finalize_centers():
        num_tot = jnp.sum(num_ref[...], axis=1, keepdims=True)    # (C, 1)
        den_tot = jnp.sum(den_ref[...], axis=1, keepdims=True)    # (C, 1)
        v_ref[...] = jnp.broadcast_to(num_tot / (den_tot + _EPS), (C, _LANES))
        loss_ref[...] = jnp.zeros_like(loss_ref)

    # ---- phase 1: membership update + squared-error accumulation ------------
    @pl.when(phase == 1)
    def _loss():
        v = v_ref[...]                                 # (C, 128) centers

        def chunk(c, acc):
            r0 = c * RC if n_chunks == 1 else pl.multiple_of(c * RC, RC)
            Ic = i_ref[pl.ds(r0, RC), :]               # (RC, 128)
            Bc = b_ref[pl.ds(r0, RC), :]               # (RC, 128)
            Uc = u_ref[:, pl.ds(r0, RC), :]            # (C, RC, 128)
            diff = Ic[None] - v[:, None, :] * Bc[None]
            D = diff * diff + _EPS
            f = _recip_pow(D, q)                       # 1 / D^q
            inv_fsum = _recip(jnp.sum(f, axis=0))      # (RC, 128)
            d = Uc - f * inv_fsum[None]                # u - new_u
            per_pos = jnp.sum(d * d, axis=0)           # (RC, 128)
            if need_mask:  # static: emitted only when spatial padding exists
                row = lax.broadcasted_iota(jnp.int32, (RC, _LANES), 0)
                lane = lax.broadcasted_iota(jnp.int32, (RC, _LANES), 1)
                pos = (t * R + r0 + row) * _LANES + lane
                per_pos = jnp.where(pos < S, per_pos, 0.0)
            return acc + per_pos

        acc0 = jnp.zeros((RC, _LANES), jnp.float32)
        if n_chunks == 1:
            acc = chunk(0, acc0)
        else:
            acc = lax.fori_loop(0, n_chunks, chunk, acc0, unroll=unroll)
        loss_ref[...] += acc


def corr_loss_pallas(I, u, b, p, block_rows=None):
    """Forward pass of CorrLoss.  Returns a shape-(1,) float32 array."""
    N, C, H, W = u.shape
    S = H * W
    p = float(p)
    assert p > 1.0, "CorrLoss requires p > 1 (q = 1/(p-1))"
    q = 1.0 / (p - 1.0)

    # Generation-aware default tile height (rows of 128 lanes).
    if block_rows is None:
        block_rows = 512
        try:   # bigger tiles on 128 MiB-VMEM parts (v5e/v6e); keep 512 on v7x
            if pltpu.get_tpu_info().vmem_capacity_bytes >= (100 << 20):
                block_rows = 1024
        except Exception:
            pass

    # Tile geometry: R rows of 128 lanes per (n, tile) grid step.
    lane_rows = -(-S // _LANES)
    vmem_budget = 24 << 20                       # double-buffered input blocks
    r_budget = vmem_budget // (2 * (C + 2) * _LANES * 4)
    R_cap = max(_SUBLANES, min(int(block_rows), int(r_budget)))
    R_cap = (R_cap // _SUBLANES) * _SUBLANES
    if lane_rows > R_cap:
        R = R_cap                                # multiple of 8, several tiles
    elif lane_rows % _SUBLANES == 0 or lane_rows <= 32:
        R = lane_rows                            # single full-extent tile / n
    else:
        R = -(-lane_rows // _SUBLANES) * _SUBLANES
    rows_pad = -(-lane_rows // R) * R
    S_pad = rows_pad * _LANES
    T = rows_pad // R
    need_mask = S_pad != S

    RC = _SUBLANES if R % _SUBLANES == 0 else R  # in-kernel row-chunk height
    n_chunks = R // RC
    unroll = n_chunks if n_chunks <= 16 else 8

    # Layout: contiguous reshapes only; pad copy only when S_pad != S.
    I2 = I.astype(jnp.float32).reshape(N, S)
    B2 = b.astype(jnp.float32).reshape(N, S)
    U2 = u.astype(jnp.float32).reshape(N, C, S)
    if need_mask:
        pad = S_pad - S
        I2 = jnp.pad(I2, ((0, 0), (0, pad)))
        B2 = jnp.pad(B2, ((0, 0), (0, pad)))
        U2 = jnp.pad(U2, ((0, 0), (0, 0), (0, pad)))
    I3 = I2.reshape(N, rows_pad, _LANES)
    B3 = B2.reshape(N, rows_pad, _LANES)
    U4 = U2.reshape(N, C, rows_pad, _LANES)

    block_bytes = (C + 2) * R * _LANES * 4
    vmem_limit = int(min(max(3 * block_bytes + (2 << 20), 16 << 20), 40 << 20))

    kernel = functools.partial(
        _corr_loss_kernel, p=p, q=q, C=C, R=R, RC=RC, n_chunks=n_chunks,
        S=S, need_mask=need_mask, unroll=unroll)

    loss_tiles = pl.pallas_call(
        kernel,
        out_shape=jax.ShapeDtypeStruct((RC, _LANES), jnp.float32),
        grid=(2, N, T),                           # (phase, batch, spatial tile)
        in_specs=[
            pl.BlockSpec((None, R, _LANES), lambda ph, n, t: (n, t, 0)),
            pl.BlockSpec((None, R, _LANES), lambda ph, n, t: (n, t, 0)),
            pl.BlockSpec((None, C, R, _LANES), lambda ph, n, t: (n, 0, t, 0)),
        ],
        out_specs=pl.BlockSpec((RC, _LANES), lambda ph, n, t: (0, 0)),
        scratch_shapes=[
            pltpu.VMEM((C, _LANES), jnp.float32),   # num partials
            pltpu.VMEM((C, _LANES), jnp.float32),   # den partials
            pltpu.VMEM((C, _LANES), jnp.float32),   # v (lane-broadcast centers)
        ],
        compiler_params=pltpu.CompilerParams(
            dimension_semantics=("arbitrary", "arbitrary", "arbitrary"),
            vmem_limit_bytes=vmem_limit),
    )(I3, B3, U4)

    # torch.mean over all N*C*H*W elements; shape (1,) like FloatTensor(1).
    return (jnp.sum(loss_tiles) / float(N * C * H * W)).reshape(1)


def corr_loss_reference(I, u, b, p):
    """Pure-jnp reference mirroring the PyTorch forward (for validation)."""
    p = float(p)
    up = u ** p                                                     # (N,C,H,W)
    b2 = b ** 2
    num = jnp.sum(I[:, None] * b[:, None] * up, axis=(0, 2, 3))     # (C,)
    den = jnp.sum(b2[:, None] * up, axis=(0, 2, 3))                 # (C,)
    v = num / (den + _EPS)
    D = (I[:, None] - v[None, :, None, None] * b[:, None]) ** 2 + _EPS
    q = 1.0 / (p - 1.0)
    Dq = D ** q
    f = 1.0 / Dq
    f_sum = jnp.sum(f, axis=1, keepdims=True)
    new_u = 1.0 / (Dq * f_sum)
    return jnp.mean((u - new_u) ** 2).reshape(1)


def _make_inputs(key, N, C, H, W):
    k1, k2, k3 = jax.random.split(key, 3)
    I = jax.random.uniform(k1, (N, H, W), jnp.float32, 0.1, 1.0)
    b = jax.random.uniform(k2, (N, H, W), jnp.float32, 0.5, 1.5)
    u_raw = jax.random.uniform(k3, (N, C, H, W), jnp.float32, 0.05, 1.0)
    u = u_raw / jnp.sum(u_raw, axis=1, keepdims=True)
    return I, u, b


if __name__ == "__main__":
    key = jax.random.PRNGKey(0)
    k_a, k_b, k_c = jax.random.split(key, 3)

    # Case 1: the module's nominal small shapes, p = 2 (integer-q fast path),
    # no padding / masking and zero relayout copies.
    N, C, H, W = 2, 4, 16, 16
    I1, u1, b1 = _make_inputs(k_a, N, C, H, W)
    out1 = jax.block_until_ready(corr_loss_pallas(I1, u1, b1, 2.0))
    ref1 = jax.block_until_ready(corr_loss_reference(I1, u1, b1, 2.0))
    assert np.allclose(np.asarray(out1), np.asarray(ref1), rtol=1e-4, atol=1e-6), (out1, ref1)

    # Case 2: p = 3 (rsqrt fast path), multi-chunk in-kernel row loop.
    I2_, u2_, b2_ = _make_inputs(k_b, 1, 4, 48, 64)
    out2 = jax.block_until_ready(corr_loss_pallas(I2_, u2_, b2_, 3.0, block_rows=24))
    ref2 = jax.block_until_ready(corr_loss_reference(I2_, u2_, b2_, 3.0))
    assert np.allclose(np.asarray(out2), np.asarray(ref2), rtol=1e-4, atol=1e-6), (out2, ref2)

    # Case 3: non-(half-)integer q (general power path), multi-tile grid,
    # spatial padding + in-kernel mask.
    I3_, u3_, b3_ = _make_inputs(k_c, 1, 3, 40, 40)
    out3 = jax.block_until_ready(corr_loss_pallas(I3_, u3_, b3_, 2.5, block_rows=8))
    ref3 = jax.block_until_ready(corr_loss_reference(I3_, u3_, b3_, 2.5))
    assert np.allclose(np.asarray(out3), np.asarray(ref3), rtol=1e-4, atol=1e-6), (out3, ref3)

    print("KERNEL_OK")
</pallas_src>

<mosaic_0001>
module attributes {stable_mosaic.version = 11 : i64} {
  func.func @_corr_loss_kernel(%arg0: i32, %arg1: i32, %arg2: i32, %arg3: memref<1x2x128xf32, #tpu.memory_space<vmem>>, %arg4: memref<1x2x128xf32, #tpu.memory_space<vmem>>, %arg5: memref<1x4x2x128xf32, #tpu.memory_space<vmem>>, %arg6: memref<2x128xf32, #tpu.memory_space<vmem>>, %arg7: memref<4x128xf32, #tpu.memory_space<vmem>>, %arg8: memref<4x128xf32, #tpu.memory_space<vmem>>, %arg9: memref<4x128xf32, #tpu.memory_space<vmem>>) attributes {dimension_semantics = [#tpu.dimension_semantics<arbitrary>, #tpu.dimension_semantics<arbitrary>, #tpu.dimension_semantics<arbitrary>], iteration_bounds = array<i64: 2, 2, 1>, scalar_prefetch = 0 : i64, scratch_operands = 3 : i64, tpu.core_type = #tpu.core_type<tc>, window_params = [{transform_indices = @transform_0, window_bounds = array<i64: 1, 2, 128>}, {transform_indices = @transform_1, window_bounds = array<i64: 1, 2, 128>}, {transform_indices = @transform_2, window_bounds = array<i64: 1, 4, 2, 128>}, {pipeline_mode = #tpu.pipeline_mode<synchronous>, transform_indices = @transform_3, window_bounds = array<i64: 2, 128>}]} {
    %c0_i32 = arith.constant 0 : i32
    %0 = arith.cmpi eq, %arg1, %c0_i32 : i32
    %c0_i32_0 = arith.constant 0 : i32
    %1 = arith.cmpi eq, %arg2, %c0_i32_0 : i32
    %2 = arith.andi %0, %1 : i1
    %c0_i32_1 = arith.constant 0 : i32
    %3 = arith.cmpi eq, %arg0, %c0_i32_1 : i32
    %4 = arith.andi %3, %2 : i1
    %5 = arith.extui %4 : i1 to i32
    %c0_i32_2 = arith.constant 0 : i32
    %6 = arith.cmpi ne, %5, %c0_i32_2 : i32
    scf.if %6 {
      %cst = arith.constant 0.000000e+00 : f32
      %17 = vector.broadcast %cst : f32 to vector<4x128xf32>
      %c0 = arith.constant 0 : index
      %c0_8 = arith.constant 0 : index
      %18 = vector.load %arg7[%c0, %c0_8] : memref<4x128xf32, #tpu.memory_space<vmem>>, vector<4x128xf32>
      tpu.vector_store %arg7[%c0, %c0_8], %17 {strides = array<i32>} : memref<4x128xf32, #tpu.memory_space<vmem>>, vector<4x128xf32>,
      %cst_9 = arith.constant 0.000000e+00 : f32
      %19 = vector.broadcast %cst_9 : f32 to vector<4x128xf32>
      %c0_10 = arith.constant 0 : index
      %c0_11 = arith.constant 0 : index
      %20 = vector.load %arg8[%c0_10, %c0_11] : memref<4x128xf32, #tpu.memory_space<vmem>>, vector<4x128xf32>
      tpu.vector_store %arg8[%c0_10, %c0_11], %19 {strides = array<i32>} : memref<4x128xf32, #tpu.memory_space<vmem>>, vector<4x128xf32>,
    } else {
    }
    %c0_i32_3 = arith.constant 0 : i32
    %7 = arith.cmpi eq, %arg0, %c0_i32_3 : i32
    %8 = arith.extui %7 : i1 to i32
    %c0_i32_4 = arith.constant 0 : i32
    %9 = arith.cmpi ne, %8, %c0_i32_4 : i32
    scf.if %9 {
      %cst = arith.constant 0.000000e+00 : f32
      %17 = vector.broadcast %cst : f32 to vector<4x128xf32>
      %c0 = arith.constant 0 : index
      %c0_8 = arith.constant 0 : index
      %c0_9 = arith.constant 0 : index
      %18 = vector.load %arg3[%c0, %c0_8, %c0_9] : memref<1x2x128xf32, #tpu.memory_space<vmem>>, vector<1x2x128xf32>
      %19 = vector.shape_cast %18 : vector<1x2x128xf32> to vector<2x128xf32>
      %c0_10 = arith.constant 0 : index
      %c0_11 = arith.constant 0 : index
      %c0_12 = arith.constant 0 : index
      %20 = vector.load %arg4[%c0_10, %c0_11, %c0_12] : memref<1x2x128xf32, #tpu.memory_space<vmem>>, vector<1x2x128xf32>
      %21 = vector.shape_cast %20 : vector<1x2x128xf32> to vector<2x128xf32>
      %c0_13 = arith.constant 0 : index
      %c0_14 = arith.constant 0 : index
      %c0_15 = arith.constant 0 : index
      %c0_16 = arith.constant 0 : index
      %22 = vector.load %arg5[%c0_13, %c0_14, %c0_15, %c0_16] : memref<1x4x2x128xf32, #tpu.memory_space<vmem>>, vector<1x4x2x128xf32>
      %23 = vector.shape_cast %22 : vector<1x4x2x128xf32> to vector<4x2x128xf32>
      %24 = arith.mulf %23, %23 : vector<4x2x128xf32>
      %25 = arith.mulf %19, %21 : vector<2x128xf32>
      %26 = vector.shape_cast %25 : vector<2x128xf32> to vector<1x2x128xf32>
      %27 = vector.broadcast %26 : vector<1x2x128xf32> to vector<4x2x128xf32>
      %28 = arith.mulf %27, %24 : vector<4x2x128xf32>
      %cst_17 = arith.constant dense<0.000000e+00> : vector<4x128xf32>
      %29 = vector.multi_reduction <add>, %28, %cst_17 [1] : vector<4x2x128xf32> to vector<4x128xf32>
      %30 = arith.addf %17, %29 : vector<4x128xf32>
      %31 = arith.mulf %21, %21 : vector<2x128xf32>
      %32 = vector.shape_cast %31 : vector<2x128xf32> to vector<1x2x128xf32>
      %33 = vector.broadcast %32 : vector<1x2x128xf32> to vector<4x2x128xf32>
      %34 = arith.mulf %33, %24 : vector<4x2x128xf32>
      %cst_18 = arith.constant dense<0.000000e+00> : vector<4x128xf32>
      %35 = vector.multi_reduction <add>, %34, %cst_18 [1] : vector<4x2x128xf32> to vector<4x128xf32>
      %36 = arith.addf %17, %35 : vector<4x128xf32>
      %c0_19 = arith.constant 0 : index
      %c0_20 = arith.constant 0 : index
      %37 = vector.load %arg7[%c0_19, %c0_20] : memref<4x128xf32, #tpu.memory_space<vmem>>, vector<4x128xf32>
      %38 = arith.addf %37, %30 : vector<4x128xf32>
      %c0_21 = arith.constant 0 : index
      %c0_22 = arith.constant 0 : index
      %39 = vector.load %arg7[%c0_21, %c0_22] : memref<4x128xf32, #tpu.memory_space<vmem>>, vector<4x128xf32>
      tpu.vector_store %arg7[%c0_21, %c0_22], %38 {strides = array<i32>} : memref<4x128xf32, #tpu.memory_space<vmem>>, vector<4x128xf32>,
      %c0_23 = arith.constant 0 : index
      %c0_24 = arith.constant 0 : index
      %40 = vector.load %arg8[%c0_23, %c0_24] : memref<4x128xf32, #tpu.memory_space<vmem>>, vector<4x128xf32>
      %41 = arith.addf %40, %36 : vector<4x128xf32>
      %c0_25 = arith.constant 0 : index
      %c0_26 = arith.constant 0 : index
      %42 = vector.load %arg8[%c0_25, %c0_26] : memref<4x128xf32, #tpu.memory_space<vmem>>, vector<4x128xf32>
      tpu.vector_store %arg8[%c0_25, %c0_26], %41 {strides = array<i32>} : memref<4x128xf32, #tpu.memory_space<vmem>>, vector<4x128xf32>,
    } else {
    }
    %c1_i32 = arith.constant 1 : i32
    %10 = arith.cmpi eq, %arg0, %c1_i32 : i32
    %11 = arith.andi %10, %2 : i1
    %12 = arith.extui %11 : i1 to i32
    %c0_i32_5 = arith.constant 0 : i32
    %13 = arith.cmpi ne, %12, %c0_i32_5 : i32
    scf.if %13 {
      %c0 = arith.constant 0 : index
      %c0_8 = arith.constant 0 : index
      %17 = vector.load %arg7[%c0, %c0_8] : memref<4x128xf32, #tpu.memory_space<vmem>>, vector<4x128xf32>
      %cst = arith.constant dense<0.000000e+00> : vector<4xf32>
      %18 = vector.multi_reduction <add>, %17, %cst [1] : vector<4x128xf32> to vector<4xf32>
      %19 = vector.shape_cast %18 : vector<4xf32> to vector<4x1xf32>
      %c0_9 = arith.constant 0 : index
      %c0_10 = arith.constant 0 : index
      %20 = vector.load %arg8[%c0_9, %c0_10] : memref<4x128xf32, #tpu.memory_space<vmem>>, vector<4x128xf32>
      %cst_11 = arith.constant dense<0.000000e+00> : vector<4xf32>
      %21 = vector.multi_reduction <add>, %20, %cst_11 [1] : vector<4x128xf32> to vector<4xf32>
      %22 = vector.shape_cast %21 : vector<4xf32> to vector<4x1xf32>
      %cst_12 = arith.constant 9.99999971E-10 : f32
      %23 = vector.broadcast %cst_12 : f32 to vector<4x1xf32>
      %24 = arith.addf %22, %23 : vector<4x1xf32>
      %25 = arith.divf %19, %24 : vector<4x1xf32>
      %26 = vector.shape_cast %25 : vector<4x1xf32> to vector<4x1xf32>
      %27 = vector.broadcast %26 : vector<4x1xf32> to vector<4x128xf32>
      %c0_13 = arith.constant 0 : index
      %c0_14 = arith.constant 0 : index
      %28 = vector.load %arg9[%c0_13, %c0_14] : memref<4x128xf32, #tpu.memory_space<vmem>>, vector<4x128xf32>
      tpu.vector_store %arg9[%c0_13, %c0_14], %27 {strides = array<i32>} : memref<4x128xf32, #tpu.memory_space<vmem>>, vector<4x128xf32>,
      %cst_15 = arith.constant 0.000000e+00 : f32
      %29 = vector.broadcast %cst_15 : f32 to vector<2x128xf32>
      %c0_16 = arith.constant 0 : index
      %c0_17 = arith.constant 0 : index
      %30 = vector.load %arg6[%c0_16, %c0_17] : memref<2x128xf32, #tpu.memory_space<vmem>>, vector<2x128xf32>
      tpu.vector_store %arg6[%c0_16, %c0_17], %29 {strides = array<i32>} : memref<2x128xf32, #tpu.memory_space<vmem>>, vector<2x128xf32>,
    } else {
    }
    %c1_i32_6 = arith.constant 1 : i32
    %14 = arith.cmpi eq, %arg0, %c1_i32_6 : i32
    %15 = arith.extui %14 : i1 to i32
    %c0_i32_7 = arith.constant 0 : i32
    %16 = arith.cmpi ne, %15, %c0_i32_7 : i32
    scf.if %16 {
      %c0 = arith.constant 0 : index
      %c0_8 = arith.constant 0 : index
      %17 = vector.load %arg9[%c0, %c0_8] : memref<4x128xf32, #tpu.memory_space<vmem>>, vector<4x128xf32>
      %cst = arith.constant 0.000000e+00 : f32
      %18 = vector.broadcast %cst : f32 to vector<2x128xf32>
      %c0_9 = arith.constant 0 : index
      %c0_10 = arith.constant 0 : index
      %c0_11 = arith.constant 0 : index
      %19 = vector.load %arg3[%c0_9, %c0_10, %c0_11] : memref<1x2x128xf32, #tpu.memory_space<vmem>>, vector<1x2x128xf32>
      %20 = vector.shape_cast %19 : vector<1x2x128xf32> to vector<2x128xf32>
      %c0_12 = arith.constant 0 : index
      %c0_13 = arith.constant 0 : index
      %c0_14 = arith.constant 0 : index
      %21 = vector.load %arg4[%c0_12, %c0_13, %c0_14] : memref<1x2x128xf32, #tpu.memory_space<vmem>>, vector<1x2x128xf32>
      %22 = vector.shape_cast %21 : vector<1x2x128xf32> to vector<2x128xf32>
      %c0_15 = arith.constant 0 : index
      %c0_16 = arith.constant 0 : index
      %c0_17 = arith.constant 0 : index
      %c0_18 = arith.constant 0 : index
      %23 = vector.load %arg5[%c0_15, %c0_16, %c0_17, %c0_18] : memref<1x4x2x128xf32, #tpu.memory_space<vmem>>, vector<1x4x2x128xf32>
      %24 = vector.shape_cast %23 : vector<1x4x2x128xf32> to vector<4x2x128xf32>
      %25 = vector.shape_cast %20 : vector<2x128xf32> to vector<1x2x128xf32>
      %26 = vector.shape_cast %17 : vector<4x128xf32> to vector<4x1x128xf32>
      %27 = vector.shape_cast %22 : vector<2x128xf32> to vector<1x2x128xf32>
      %28 = vector.broadcast %26 : vector<4x1x128xf32> to vector<4x2x128xf32>
      %29 = vector.broadcast %27 : vector<1x2x128xf32> to vector<4x2x128xf32>
      %30 = arith.mulf %28, %29 : vector<4x2x128xf32>
      %31 = vector.broadcast %25 : vector<1x2x128xf32> to vector<4x2x128xf32>
      %32 = arith.subf %31, %30 : vector<4x2x128xf32>
      %33 = arith.mulf %32, %32 : vector<4x2x128xf32>
      %cst_19 = arith.constant 9.99999971E-10 : f32
      %34 = vector.broadcast %cst_19 : f32 to vector<4x2x128xf32>
      %35 = arith.addf %33, %34 : vector<4x2x128xf32>
      %36 = tpu.reciprocal %35 {approx = true} : vector<4x2x128xf32> -> vector<4x2x128xf32>
      %37 = arith.mulf %35, %36 : vector<4x2x128xf32>
      %cst_20 = arith.constant 2.000000e+00 : f32
      %38 = vector.broadcast %cst_20 : f32 to vector<4x2x128xf32>
      %39 = arith.subf %38, %37 : vector<4x2x128xf32>
      %40 = arith.mulf %36, %39 : vector<4x2x128xf32>
      %cst_21 = arith.constant dense<0.000000e+00> : vector<2x128xf32>
      %41 = vector.multi_reduction <add>, %40, %cst_21 [0] : vector<4x2x128xf32> to vector<2x128xf32>
      %42 = tpu.reciprocal %41 {approx = true} : vector<2x128xf32> -> vector<2x128xf32>
      %43 = arith.mulf %41, %42 : vector<2x128xf32>
      %cst_22 = arith.constant 2.000000e+00 : f32
      %44 = vector.broadcast %cst_22 : f32 to vector<2x128xf32>
      %45 = arith.subf %44, %43 : vector<2x128xf32>
      %46 = arith.mulf %42, %45 : vector<2x128xf32>
      %47 = vector.shape_cast %46 : vector<2x128xf32> to vector<1x2x128xf32>
      %48 = vector.broadcast %47 : vector<1x2x128xf32> to vector<4x2x128xf32>
      %49 = arith.mulf %40, %48 : vector<4x2x128xf32>
      %50 = arith.subf %24, %49 : vector<4x2x128xf32>
      %51 = arith.mulf %50, %50 : vector<4x2x128xf32>
      %cst_23 = arith.constant dense<0.000000e+00> : vector<2x128xf32>
      %52 = vector.multi_reduction <add>, %51, %cst_23 [0] : vector<4x2x128xf32> to vector<2x128xf32>
      %53 = arith.addf %18, %52 : vector<2x128xf32>
      %c0_24 = arith.constant 0 : index
      %c0_25 = arith.constant 0 : index
      %54 = vector.load %arg6[%c0_24, %c0_25] : memref<2x128xf32, #tpu.memory_space<vmem>>, vector<2x128xf32>
      %55 = arith.addf %54, %53 : vector<2x128xf32>
      %c0_26 = arith.constant 0 : index
      %c0_27 = arith.constant 0 : index
      %56 = vector.load %arg6[%c0_26, %c0_27] : memref<2x128xf32, #tpu.memory_space<vmem>>, vector<2x128xf32>
      tpu.vector_store %arg6[%c0_26, %c0_27], %55 {strides = array<i32>} : memref<2x128xf32, #tpu.memory_space<vmem>>, vector<2x128xf32>,
    } else {
    }
    return
  }
  func.func @transform_0(%arg0: i32, %arg1: i32, %arg2: i32) -> (i32, i32, i32) {
    %c0_i32 = arith.constant 0 : i32
    %c0_i32_0 = arith.constant 0 : i32
    return %arg1, %arg2, %c0_i32 : i32, i32, i32
  }
  func.func @transform_1(%arg0: i32, %arg1: i32, %arg2: i32) -> (i32, i32, i32) {
    %c0_i32 = arith.constant 0 : i32
    %c0_i32_0 = arith.constant 0 : i32
    return %arg1, %arg2, %c0_i32 : i32, i32, i32
  }
  func.func @transform_2(%arg0: i32, %arg1: i32, %arg2: i32) -> (i32, i32, i32, i32) {
    %c0_i32 = arith.constant 0 : i32
    %c0_i32_0 = arith.constant 0 : i32
    %c0_i32_1 = arith.constant 0 : i32
    return %arg1, %c0_i32, %arg2, %c0_i32_0 : i32, i32, i32, i32
  }
  func.func @transform_3(%arg0: i32, %arg1: i32, %arg2: i32) -> (i32, i32) {
    %c0_i32 = arith.constant 0 : i32
    %c0_i32_0 = arith.constant 0 : i32
    %c0_i32_1 = arith.constant 0 : i32
    return %c0_i32, %c0_i32_0 : i32, i32
  }
}

</mosaic_0001>

<llo_original>
// kernel: tpu_custom_call.1
$region0: #{tpu_custom_call.1}
  #allocation0 [shape = 'u32[]', space=smem, size = 0x4, offset = 0x4, fixed_abs, tag = 'smem constant byte address 0x4 - core index']
  #allocation1 [shape = 'u32[144,128]{1,0:T(1,128)}', space=vmem, size = 0x12000, scoped, tag = 'internal scratch']
  #allocation2 [shape = 'f32[4,128]{1,0:T(4,128)}', space=vmem, size = 0x800, scoped, tag = 'scratch operand']
  #allocation3 [shape = 'f32[4,128]{1,0:T(4,128)}', space=vmem, size = 0x800, scoped, tag = 'scratch operand']
  #allocation4 [shape = 'f32[4,128]{1,0:T(4,128)}', space=vmem, size = 0x800, scoped, tag = 'scratch operand']
  %s0 = inlined_call_operand.hbm [shape: f32[2,2,128], index: 0, kind: input, shape index: {}]
  %s1 = inlined_call_operand.hbm [shape: f32[2,2,128], index: 1, kind: input, shape index: {}]
  %s2 = inlined_call_operand.hbm [shape: f32[2,4,2,128], index: 2, kind: input, shape index: {}]
  %s3 = inlined_call_operand.hbm [shape: f32[2,128], index: 3, kind: output, shape index: {}]
  %s4 = sld [smem:[#allocation0]]
  $region73: #{tpu_custom_call.1} parent=0
    _
  %s6 = ssub.s32 1, %s4
  %s7 = scalar_select 0, %s6, %s4
  $region1: #{tpu_custom_call.1} parent=0
    #allocation5 [shape = 'u8[2048]{0}', space=vmem, size = 0x800, scoped, tag = 'input window, operand 0']
    #allocation6 [shape = 's32[2]{0}', space=sflag, size = 0x8, scoped, tag = 'scoped memory for tpu_custom_call.1']
    #allocation7 [shape = 's32[2]{0}', space=sflag, size = 0x8, scoped, tag = 'scoped memory for tpu_custom_call.1']
    #allocation8 [shape = 'u8[2048]{0}', space=vmem, size = 0x800, scoped, tag = 'input window, operand 1']
    #allocation9 [shape = 's32[2]{0}', space=sflag, size = 0x8, scoped, tag = 'scoped memory for tpu_custom_call.1']
    #allocation10 [shape = 'u8[8192]{0}', space=vmem, size = 0x2000, scoped, tag = 'input window, operand 2']
    #allocation11 [shape = 'u8[1024]{0}', space=vmem, size = 0x400, scoped, tag = 'output window, operand 0, single buffered']
    %8 = vsyncpa [#allocation6], 0
    %s9 = scalar_lea.sflag [#allocation6], 1
    %10 = vsyncpa %s9, 0
    %11 = vsyncpa [#allocation9], 0
    %s12 = scalar_lea.sflag [#allocation9], 1
    %13 = vsyncpa %s12, 0
    %14 = vsyncpa [#allocation7], 0
    loop: start=0, step=1, limit=6
    $region2: #{tpu_custom_call.1} parent=1 // loop_pre_header
      _
    $region3: #{tpu_custom_call.1} parent=1 // loop_header
      %s16 = sphi 0, %s20
      %p17 = scmp.ge.s32.totalorder %s16, 6
      %s23 = sphi 0, %s42
      %s24 = sphi 0, %s38
      %s25 = sphi 0, %s34
      %s26 = sphi 0, %s23
      %s27 = sphi 0, %s24
      %s28 = sphi 0, %s25
      %s29 = sphi 0, %s26
      %s30 = sphi 0, %s27
      %s31 = sphi 0, %s28
      %s47 = sphi 0, %s49
      %s50 = sphi 0, %s47
      %s51 = sphi 0, %s50
      %s67 = sphi 0, %s51
      %s75 = sphi 0, %s77
      %s78 = sphi 0, %s75
      %s79 = sphi 0, %s78
      %s95 = sphi 0, %s79
      %s103 = sphi 0, %s105
      %s106 = sphi 0, %s103
      %s107 = sphi 0, %s106
      %s123 = sphi 0, %s107
      %s127 = sphi 0, %s127
      %s129 = sphi 0, %s127
      %s130 = sphi 0, %s129
      %s144 = sphi 0, %s130
    $region4: #{tpu_custom_call.1} parent=1 // loop_header_branch
      %19 = sbr.rel (%p17) target = $region8
    $region5: #{tpu_custom_call.1} parent=1 // loop_body
      %s21 = ssub.s32 %s16, 1
      %s22 = ssub.s32 %s16, 2
      %s32 = sadd.s32 1, %s25
      %p33 = scmp.ge.s32.totalorder %s32, 1
      %s34 = scalar_select %p33, 0, %s32
      %s35 = sadd.s32 1, %s24
      %s36 = scalar_select %p33, %s35, %s24
      %p37 = scmp.ge.s32.totalorder %s36, 2
      %s38 = scalar_select %p37, 0, %s36
      %s39 = sadd.s32 1, %s23
      %s40 = scalar_select %p37, %s39, %s23
      %p41 = scmp.ge.s32.totalorder %s40, 2
      %s42 = scalar_select %p41, 0, %s40
      %s43 = ssub.s32 %s24, %s38
      %s44 = ssub.s32 %s25, %s34
      %s45 = sor.u32 %s43, %s44
      %p46 = scmp.eq.s32.totalorder %s45, 0
      %s48 = sadd.s32 %s47, 1
      %s49 = scalar_select %p46, %s47, %s48
      %p52 = pneg %p46
      %p53 = scmp.eq.s32.totalorder %s16, 3
      %p54 = por %p52, %p53
      %p55 = scmp.ne.s32.totalorder %s47, %s50
      %p56 = scmp.eq.s32.totalorder %s16, 0
      %p57 = por %p55, %p56
      %p58 = scmp.ne.s32.totalorder %s47, %s50
      %p59 = scmp.eq.s32.totalorder %s21, 3
      %p60 = por %p58, %p59
      %p61 = scmp.ne.s32.totalorder %s50, %s51
      %p62 = scmp.eq.s32.totalorder %s21, 0
      %p63 = por %p61, %p62
      %p64 = scmp.ne.s32.totalorder %s50, %s51
      %p65 = scmp.eq.s32.totalorder %s22, 3
      %p66 = por %p64, %p65
      %p68 = scmp.ne.s32.totalorder %s51, %s67
      %p69 = scmp.eq.s32.totalorder %s22, 0
      %p70 = por %p68, %p69
      %s71 = ssub.s32 %s24, %s38
      %s72 = ssub.s32 %s25, %s34
      %s73 = sor.u32 %s71, %s72
      %p74 = scmp.eq.s32.totalorder %s73, 0
      %s76 = sadd.s32 %s75, 1
      %s77 = scalar_select %p74, %s75, %s76
      %p80 = pneg %p74
      %p81 = scmp.eq.s32.totalorder %s16, 3
      %p82 = por %p80, %p81
      %p83 = scmp.ne.s32.totalorder %s75, %s78
      %p84 = scmp.eq.s32.totalorder %s16, 0
      %p85 = por %p83, %p84
      %p86 = scmp.ne.s32.totalorder %s75, %s78
      %p87 = scmp.eq.s32.totalorder %s21, 3
      %p88 = por %p86, %p87
      %p89 = scmp.ne.s32.totalorder %s78, %s79
      %p90 = scmp.eq.s32.totalorder %s21, 0
      %p91 = por %p89, %p90
      %p92 = scmp.ne.s32.totalorder %s78, %s79
      %p93 = scmp.eq.s32.totalorder %s22, 3
      %p94 = por %p92, %p93
      %p96 = scmp.ne.s32.totalorder %s79, %s95
      %p97 = scmp.eq.s32.totalorder %s22, 0
      %p98 = por %p96, %p97
      %s99 = ssub.s32 %s24, %s38
      %s100 = ssub.s32 %s25, %s34
      %s101 = sor.u32 %s99, %s100
      %p102 = scmp.eq.s32.totalorder %s101, 0
      %s104 = sadd.s32 %s103, 1
      %s105 = scalar_select %p102, %s103, %s104
      %p108 = pneg %p102
      %p109 = scmp.eq.s32.totalorder %s16, 3
      %p110 = por %p108, %p109
      %p111 = scmp.ne.s32.totalorder %s103, %s106
      %p112 = scmp.eq.s32.totalorder %s16, 0
      %p113 = por %p111, %p112
      %p114 = scmp.ne.s32.totalorder %s103, %s106
      %p115 = scmp.eq.s32.totalorder %s21, 3
      %p116 = por %p114, %p115
      %p117 = scmp.ne.s32.totalorder %s106, %s107
      %p118 = scmp.eq.s32.totalorder %s21, 0
      %p119 = por %p117, %p118
      %p120 = scmp.ne.s32.totalorder %s106, %s107
      %p121 = scmp.eq.s32.totalorder %s22, 3
      %p122 = por %p120, %p121
      %p124 = scmp.ne.s32.totalorder %s107, %s123
      %p125 = scmp.eq.s32.totalorder %s22, 0
      %p126 = por %p124, %p125
      %s128 = sadd.s32 %s127, 1
      %p131 = scmp.eq.s32.totalorder %s16, 3
      %p132 = scmp.ne.s32.totalorder %s127, %s129
      %p133 = scmp.eq.s32.totalorder %s16, 0
      %p134 = por %p132, %p133
      %p135 = scmp.ne.s32.totalorder %s127, %s129
      %p136 = scmp.eq.s32.totalorder %s21, 3
      %p137 = por %p135, %p136
      %p138 = scmp.ne.s32.totalorder %s129, %s130
      %p139 = scmp.eq.s32.totalorder %s21, 0
      %p140 = por %p138, %p139
      %p141 = scmp.ne.s32.totalorder %s129, %s130
      %p142 = scmp.eq.s32.totalorder %s22, 3
      %p143 = por %p141, %p142
      %p145 = scmp.ne.s32.totalorder %s130, %s144
      %p146 = scmp.eq.s32.totalorder %s22, 0
      %p147 = por %p145, %p146
      %p148 = scmp.le.s32.totalorder 1, %s16
      %p149 = scmp.lt.s32.totalorder %s16, 5
      %p150 = pnand %p148, %p149
      %p151 = pneg %p150
      // Predicated region
      $region9: #{tpu_custom_call.1} parent=5 // pred_check
        _
      $region10: #{tpu_custom_call.1} parent=5 // pred_check_branch
        %153 = sbr.rel (%p150) target = $region12
      $region11: #{tpu_custom_call.1} parent=5 // pred_region
        %s154 = ssub.s32 %s16, 1
      $region12: #{tpu_custom_call.1} parent=5 // pred_fallthru
        _
      %p155 = scmp.lt.s32.totalorder %s16, 4
      // Predicated region
      $region13: #{tpu_custom_call.1} parent=5 // pred_check
        %p156 = pneg %p155
      $region14: #{tpu_custom_call.1} parent=5 // pred_check_branch
        %158 = sbr.rel (%p156) target = $region16
      $region15: #{tpu_custom_call.1} parent=5 // pred_region
        // Predicated region
        $region17: #{tpu_custom_call.1} parent=15 // pred_check
          %p159 = pneg %p57
        $region18: #{tpu_custom_call.1} parent=15 // pred_check_branch
          %161 = sbr.rel (%p159) target = $region20
        $region19: #{tpu_custom_call.1} parent=15 // pred_region
          %s162 = sand.u32 %s47, 1
          %s163 = scalar_lea.sflag [#allocation6], %s162
          %s164 = sand.u32 %s47, 1
          %s165 = smul.addr %s164, 2
          %s166 = scalar_lea.vmem [#allocation5], %s165
          %s168 = ssub.s32 32, 32
          %169 = vsyncadd %s163, %s168
          %s170 = sadd.s32 %s25, %s24
          %s171 = smul.addr %s170, 32
          %s172 = scalar_lea.hbm %s0, %s171
          %s174 = sshll.u32 %s166, 4
          %s175 = int_to_ptr.vmem [resolvable:$true] %s174
          %177 = dma.hbm_to_vmem [thread:$0]  %s172, 32, %s175, %s163
        $region20: #{tpu_custom_call.1} parent=15 // pred_fallthru
          _
        // Predicated region
        $region21: #{tpu_custom_call.1} parent=15 // pred_check
          %p178 = pneg %p85
        $region22: #{tpu_custom_call.1} parent=15 // pred_check_branch
          %180 = sbr.rel (%p178) target = $region24
        $region23: #{tpu_custom_call.1} parent=15 // pred_region
          %s181 = sand.u32 %s16, 1
          %s182 = scalar_lea.sflag [#allocation9], %s181
          %s183 = sand.u32 %s75, 1
          %s184 = smul.addr %s183, 2
          %s185 = scalar_lea.vmem [#allocation8], %s184
          %s187 = ssub.s32 32, 32
          %188 = vsyncadd %s182, %s187
          %s189 = sadd.s32 %s25, %s24
          %s190 = smul.addr %s189, 32
          %s191 = scalar_lea.hbm %s1, %s190
          %s193 = sshll.u32 %s185, 4
          %s194 = int_to_ptr.vmem [resolvable:$true] %s193
          %196 = dma.hbm_to_vmem [thread:$0]  %s191, 32, %s194, %s182
        $region24: #{tpu_custom_call.1} parent=15 // pred_fallthru
          _
        // Predicated region
        $region25: #{tpu_custom_call.1} parent=15 // pred_check
          %p197 = pneg %p113
        $region26: #{tpu_custom_call.1} parent=15 // pred_check_branch
          %199 = sbr.rel (%p197) target = $region28
        $region27: #{tpu_custom_call.1} parent=15 // pred_region
          %s200 = sand.u32 %s16, 1
          %s201 = scalar_lea.sflag [#allocation9], %s200
          %s202 = sand.u32 %s103, 1
          %s203 = smul.addr %s202, 8
          %s204 = scalar_lea.vmem [#allocation10], %s203
          %s206 = ssub.s32 128, 128
          %207 = vsyncadd %s201, %s206
          %s208 = smul.addr %s24, 4
          %s209 = sadd.s32 %s25, %s208
          %s210 = smul.addr %s209, 32
          %s211 = scalar_lea.hbm %s2, %s210
          %s212 = sshll.u32 %s204, 4
          %s213 = int_to_ptr.vmem [resolvable:$true] %s212
          %218 = dma.hbm_to_vmem [thread:$0]  %s211, 128, %s213, %s201, 32, 32, 2
        $region28: #{tpu_custom_call.1} parent=15 // pred_fallthru
          _
      $region16: #{tpu_custom_call.1} parent=5 // pred_fallthru
        _
      %p219 = scmp.le.s32.totalorder 1, %s16
      %p220 = scmp.lt.s32.totalorder %s16, 5
      %p221 = pnand %p219, %p220
      %p222 = pneg %p221
      // Predicated region
      $region29: #{tpu_custom_call.1} parent=5 // pred_check
        _
      $region30: #{tpu_custom_call.1} parent=5 // pred_check_branch
        %224 = sbr.rel (%p221) target = $region32
      $region31: #{tpu_custom_call.1} parent=5 // pred_region
        %s225 = ssub.s32 %s16, 1
        %s226 = sand.u32 %s50, 1
        %s227 = scalar_lea.sflag [#allocation6], %s226
        %s228 = sand.u32 %s50, 1
        %s229 = smul.addr %s228, 2
        %s230 = scalar_lea.vmem [#allocation5], %s229
        // Predicated region
        $region33: #{tpu_custom_call.1} parent=31 // pred_check
          %p231 = pneg %p63
        $region34: #{tpu_custom_call.1} parent=31 // pred_check_branch
          %233 = sbr.rel (%p231) target = $region36
        $region35: #{tpu_custom_call.1} parent=31 // pred_region
          %234 = dma.done %s227, 32
        $region36: #{tpu_custom_call.1} parent=31 // pred_fallthru
          _
        %s235 = sand.u32 %s21, 1
        %s236 = scalar_lea.sflag [#allocation9], %s235
        %s237 = sand.u32 %s78, 1
        %s238 = smul.addr %s237, 2
        %s239 = scalar_lea.vmem [#allocation8], %s238
        // Predicated region
        $region37: #{tpu_custom_call.1} parent=31 // pred_check
          %p240 = pneg %p91
        $region38: #{tpu_custom_call.1} parent=31 // pred_check_branch
          %242 = sbr.rel (%p240) target = $region40
        $region39: #{tpu_custom_call.1} parent=31 // pred_region
          %243 = dma.done %s236, 32
        $region40: #{tpu_custom_call.1} parent=31 // pred_fallthru
          _
        %s244 = sand.u32 %s21, 1
        %s245 = scalar_lea.sflag [#allocation9], %s244
        %s246 = sand.u32 %s106, 1
        %s247 = smul.addr %s246, 8
        %s248 = scalar_lea.vmem [#allocation10], %s247
        // Predicated region
        $region41: #{tpu_custom_call.1} parent=31 // pred_check
          %p249 = pneg %p119
        $region42: #{tpu_custom_call.1} parent=31 // pred_check_branch
          %251 = sbr.rel (%p249) target = $region44
        $region43: #{tpu_custom_call.1} parent=31 // pred_region
          %252 = dma.done %s245, 128
        $region44: #{tpu_custom_call.1} parent=31 // pred_fallthru
          _
        %s253 = sand.u32 %s50, 1
        %s254 = scalar_lea.sflag [#allocation6], %s253
        %s255 = sand.u32 %s50, 1
        %s256 = smul.addr %s255, 2
        %s257 = scalar_lea.vmem [#allocation5], %s256
        %p258 = pneg %p63
        %p259 = pneg %p60
        %s260 = sand.u32 %s21, 1
        %s261 = scalar_lea.sflag [#allocation9], %s260
        %s262 = sand.u32 %s78, 1
        %s263 = smul.addr %s262, 2
        %s264 = scalar_lea.vmem [#allocation8], %s263
        %p265 = pneg %p91
        %p266 = pneg %p88
        %s267 = sand.u32 %s21, 1
        %s268 = scalar_lea.sflag [#allocation9], %s267
        %s269 = sand.u32 %s106, 1
        %s270 = smul.addr %s269, 8
        %s271 = scalar_lea.vmem [#allocation10], %s270
        %p272 = pneg %p119
        %p273 = pneg %p116
        %p274 = pneg %p140
        %p275 = pneg %p137
        %p276 = scmp.eq.s32.totalorder %s27, 0
        %p277 = scmp.eq.s32.totalorder %s28, 0
        %p278 = pnand %p276, %p277
        %p279 = pneg %p278
        %p280 = scmp.eq.s32.totalorder %s26, 0
        %p281 = pnand %p280, %p279
        %p282 = pneg %p281
        // Predicated region
        $region45: #{tpu_custom_call.1} parent=31 // pred_check
          _
        $region46: #{tpu_custom_call.1} parent=31 // pred_check_branch
          %284 = sbr.rel (%p281) target = $region48
        $region47: #{tpu_custom_call.1} parent=31 // pred_region
          %285 = vst [vmem:[#allocation2] sm:$0xf] 0.0
          %286 = vst [vmem:[#allocation3] sm:$0xf] 0.0
        $region48: #{tpu_custom_call.1} parent=31 // pred_fallthru
          _
        // Predicated region
        $region49: #{tpu_custom_call.1} parent=31 // pred_check
          %p287 = pneg %p280
        $region50: #{tpu_custom_call.1} parent=31 // pred_check_branch
          %289 = sbr.rel (%p287) target = $region52
        $region51: #{tpu_custom_call.1} parent=31 // pred_region
          %v290 = vld [vmem:[%s230] sm:$0x3]
          %v291 = vld [vmem:[%s239] sm:$0x3]
          %v292 = vld [vmem:[%s248] sm:$0x3]
          %v293 = vld [vmem:[%s248 + $0x2] sm:$0x3]
          %v294 = vld [vmem:[%s248 + $0x4] sm:$0x3]
          %v295 = vld [vmem:[%s248 + $0x6] sm:$0x3]
          %v296 = vmul.f32 %v292, %v292
          %v297 = vmul.f32 %v293, %v293
          %v298 = vmul.f32 %v294, %v294
          %v299 = vmul.f32 %v295, %v295
          %v300 = vmul.f32 %v290, %v291
          %v301 = vmul.f32 %v300, %v296
          %v302 = vmul.f32 %v300, %v297
          %v303 = vmul.f32 %v300, %v298
          %v304 = vmul.f32 %v300, %v299
          %vm305 = vcmask 1041408
          %v306 = vsel %vm305, %v301, 0.0
          %v307 = vrot.slane %v306, 4
          %v308 = vadd.f32 %v306, %v307
          %v309 = vrot.slane %v308, 2
          %v310 = vadd.f32 %v308, %v309
          %v311 = vrot.slane %v310, 1
          %v312 = vadd.f32 %v310, %v311
          %v313 = vsel %vm305, %v302, 0.0
          %v314 = vrot.slane %v313, 4
          %v315 = vadd.f32 %v313, %v314
          %v316 = vrot.slane %v315, 2
          %v317 = vadd.f32 %v315, %v316
          %v318 = vrot.slane %v317, 1
          %v319 = vadd.f32 %v317, %v318
          %v320 = vsel %vm305, %v303, 0.0
          %v321 = vrot.slane %v320, 4
          %v322 = vadd.f32 %v320, %v321
          %v323 = vrot.slane %v322, 2
          %v324 = vadd.f32 %v322, %v323
          %v325 = vrot.slane %v324, 1
          %v326 = vadd.f32 %v324, %v325
          %v327 = vsel %vm305, %v304, 0.0
          %v328 = vrot.slane %v327, 4
          %v329 = vadd.f32 %v327, %v328
          %v330 = vrot.slane %v329, 2
          %v331 = vadd.f32 %v329, %v330
          %v332 = vrot.slane %v331, 1
          %v333 = vadd.f32 %v331, %v332
          %v334 = vadd.f32 %v312, 0.0
          %v335 = vadd.f32 %v319, 0.0
          %v336 = vadd.f32 %v326, 0.0
          %v337 = vadd.f32 %v333, 0.0
          %v338 = vmul.f32 %v291, %v291
          %v339 = vmul.f32 %v338, %v296
          %v340 = vmul.f32 %v338, %v297
          %v341 = vmul.f32 %v338, %v298
          %v342 = vmul.f32 %v338, %v299
          %v343 = vsel %vm305, %v339, 0.0
          %v344 = vrot.slane %v343, 4
          %v345 = vadd.f32 %v343, %v344
          %v346 = vrot.slane %v345, 2
          %v347 = vadd.f32 %v345, %v346
          %v348 = vrot.slane %v347, 1
          %v349 = vadd.f32 %v347, %v348
          %v350 = vsel %vm305, %v340, 0.0
          %v351 = vrot.slane %v350, 4
          %v352 = vadd.f32 %v350, %v351
          %v353 = vrot.slane %v352, 2
          %v354 = vadd.f32 %v352, %v353
          %v355 = vrot.slane %v354, 1
          %v356 = vadd.f32 %v354, %v355
          %v357 = vsel %vm305, %v341, 0.0
          %v358 = vrot.slane %v357, 4
          %v359 = vadd.f32 %v357, %v358
          %v360 = vrot.slane %v359, 2
          %v361 = vadd.f32 %v359, %v360
          %v362 = vrot.slane %v361, 1
          %v363 = vadd.f32 %v361, %v362
          %v364 = vsel %vm305, %v342, 0.0
          %v365 = vrot.slane %v364, 4
          %v366 = vadd.f32 %v364, %v365
          %v367 = vrot.slane %v366, 2
          %v368 = vadd.f32 %v366, %v367
          %v369 = vrot.slane %v368, 1
          %v370 = vadd.f32 %v368, %v369
          %v371 = vadd.f32 %v349, 0.0
          %v372 = vadd.f32 %v356, 0.0
          %v373 = vadd.f32 %v363, 0.0
          %v374 = vadd.f32 %v370, 0.0
          %v375 = vld [vmem:[#allocation2] sm:$0xf]
          %vm380 = vcmask 1041409
          %v381 = vsel %vm380, %v335, %v334
          %vm382 = vcmask 1042434
          %v383 = vsel %vm382, %v336, %v381
          %vm384 = vcmask 1043459
          %v385 = vsel %vm384, %v337, %v383
          %v387 = vadd.f32 %v375, %v385
          %388 = vst [vmem:[#allocation2] sm:$0xf] %v387
          %v389 = vld [vmem:[#allocation3] sm:$0xf]
          %v394 = vsel %vm380, %v372, %v371
          %v395 = vsel %vm382, %v373, %v394
          %v396 = vsel %vm384, %v374, %v395
          %v398 = vadd.f32 %v389, %v396
          %399 = vst [vmem:[#allocation3] sm:$0xf] %v398
        $region52: #{tpu_custom_call.1} parent=31 // pred_fallthru
          _
        %p400 = scmp.eq.s32.totalorder %s26, 1
        %p401 = pnand %p400, %p279
        %p402 = pneg %p401
        // Predicated region
        $region53: #{tpu_custom_call.1} parent=31 // pred_check
          _
        $region54: #{tpu_custom_call.1} parent=31 // pred_check_branch
          %404 = sbr.rel (%p401) target = $region56
        $region55: #{tpu_custom_call.1} parent=31 // pred_region
          %v405 = vld [vmem:[#allocation2] sm:$0xf]
          %vm406 = vcmask 1043456
          %v407 = vsel %vm406, %v405, 0.0
          %408 = vadd.xlane.f32.xlu0 %v407
          %v409 = vpop.xlane.xlu0 %408
          %v410 = vld [vmem:[#allocation3] sm:$0xf]
          %v411 = vsel %vm406, %v410, 0.0
          %412 = vadd.xlane.f32.xlu0 %v411
          %v413 = vpop.xlane.xlu0 %412
          %v414 = vadd.f32 %v413, 1e-09
          %v415 = vrcp.pop %v414
          %v416 = vmul.f32 %v409, %v415
          %417 = vst [vmem:[#allocation4] sm:$0xf] %v416
          %418 = vst [vmem:[#allocation11] sm:$0x3] 0.0
        $region56: #{tpu_custom_call.1} parent=31 // pred_fallthru
          _
        // Predicated region
        $region57: #{tpu_custom_call.1} parent=31 // pred_check
          %p419 = pneg %p400
        $region58: #{tpu_custom_call.1} parent=31 // pred_check_branch
          %421 = sbr.rel (%p419) target = $region60
        $region59: #{tpu_custom_call.1} parent=31 // pred_region
          %v422 = vld [vmem:[#allocation4] sm:$0xf]
          %v423 = vld [vmem:[%s230] sm:$0x3]
          %v424 = vld [vmem:[%s239] sm:$0x3]
          %v425 = vld [vmem:[%s248] sm:$0x3]
          %v426 = vld [vmem:[%s248 + $0x2] sm:$0x3]
          %v427 = vld [vmem:[%s248 + $0x4] sm:$0x3]
          %v428 = vld [vmem:[%s248 + $0x6] sm:$0x3]
          %v431 = vunpack.c.l.s4 1966171168
          %v432 = vunpack.c.0.s8 %v431
          %v433 = vlaneseq
          %v434 = vshrl.u32 %v433, 7
          %v435 = vsub.s32 %v432, %v434
          %v436 = vrot.slane %v422, %v435
          %v437 = vcombine.high %v436, %v436
          %v439 = vunpack.c.l.s4 1966171168
          %v440 = vunpack.c.0.s8 %v439
          %v441 = vlaneseq
          %v442 = vshrl.u32 %v441, 7
          %v443 = vsub.s32 %v440, %v442
          %v444 = vrot.slane %v436, %v443
          %v446 = vunpack.c.l.s4 1966171168
          %v447 = vunpack.c.0.s8 %v446
          %v448 = vlaneseq
          %v449 = vshrl.u32 %v448, 7
          %v450 = vsub.s32 %v447, %v449
          %v451 = vrot.slane %v437, %v450
          %v452 = vcombine.high %v444, %v444
          %v453 = vcombine.high %v451, %v451
          %v454 = vlaneseq
          %v455 = vshrl.u32 %v454, 7
          %v456 = vsub.s32 0, %v455
          %v457 = vrot.slane %v444, %v456
          %v458 = vlaneseq
          %v459 = vshrl.u32 %v458, 7
          %v460 = vsub.s32 0, %v459
          %v461 = vrot.slane %v451, %v460
          %v462 = vlaneseq
          %v463 = vshrl.u32 %v462, 7
          %v464 = vsub.s32 0, %v463
          %v465 = vrot.slane %v452, %v464
          %v466 = vlaneseq
          %v467 = vshrl.u32 %v466, 7
          %v468 = vsub.s32 0, %v467
          %v469 = vrot.slane %v453, %v468
          %v474 = vmul.f32 %v457, %v424
          %v475 = vmul.f32 %v461, %v424
          %v476 = vmul.f32 %v465, %v424
          %v477 = vmul.f32 %v469, %v424
          %v478 = vsub.f32 %v423, %v474
          %v479 = vsub.f32 %v423, %v475
          %v480 = vsub.f32 %v423, %v476
          %v481 = vsub.f32 %v423, %v477
          %v482 = vmul.f32 %v478, %v478
          %v483 = vmul.f32 %v479, %v479
          %v484 = vmul.f32 %v480, %v480
          %v485 = vmul.f32 %v481, %v481
          %v486 = vadd.f32 %v482, 1e-09
          %v487 = vadd.f32 %v483, 1e-09
          %v488 = vadd.f32 %v484, 1e-09
          %v489 = vadd.f32 %v485, 1e-09
          %v490 = vrcp.pop %v486
          %v491 = vrcp.pop %v487
          %v492 = vrcp.pop %v488
          %v493 = vrcp.pop %v489
          %v494 = vmul.f32 %v486, %v490
          %v495 = vmul.f32 %v487, %v491
          %v496 = vmul.f32 %v488, %v492
          %v497 = vmul.f32 %v489, %v493
          %v498 = vsub.f32 2.0, %v494
          %v499 = vsub.f32 2.0, %v495
          %v500 = vsub.f32 2.0, %v496
          %v501 = vsub.f32 2.0, %v497
          %v502 = vmul.f32 %v490, %v498
          %v503 = vmul.f32 %v491, %v499
          %v504 = vmul.f32 %v492, %v500
          %v505 = vmul.f32 %v493, %v501
          %vm506 = vcmask 1041408
          %v507 = vsel %vm506, %v502, 0.0
          %v508 = vsel %vm506, %v503, 0.0
          %v509 = vadd.f32 %v507, %v508
          %v510 = vsel %vm506, %v504, 0.0
          %v511 = vadd.f32 %v509, %v510
          %v512 = vsel %vm506, %v505, 0.0
          %v513 = vadd.f32 %v511, %v512
          %v514 = vrcp.pop %v513
          %v515 = vmul.f32 %v513, %v514
          %v516 = vsub.f32 2.0, %v515
          %v517 = vmul.f32 %v514, %v516
          %v518 = vmul.f32 %v502, %v517
          %v519 = vmul.f32 %v503, %v517
          %v520 = vmul.f32 %v504, %v517
          %v521 = vmul.f32 %v505, %v517
          %v522 = vsub.f32 %v425, %v518
          %v523 = vsub.f32 %v426, %v519
          %v524 = vsub.f32 %v427, %v520
          %v525 = vsub.f32 %v428, %v521
          %v526 = vmul.f32 %v522, %v522
          %v527 = vmul.f32 %v523, %v523
          %v528 = vmul.f32 %v524, %v524
          %v529 = vmul.f32 %v525, %v525
          %v530 = vsel %vm506, %v526, 0.0
          %v531 = vsel %vm506, %v527, 0.0
          %v532 = vadd.f32 %v530, %v531
          %v533 = vsel %vm506, %v528, 0.0
          %v534 = vadd.f32 %v532, %v533
          %v535 = vsel %vm506, %v529, 0.0
          %v536 = vadd.f32 %v534, %v535
          %v537 = vadd.f32 %v536, 0.0
          %v538 = vld [vmem:[#allocation11] sm:$0x3]
          %v539 = vadd.f32 %v538, %v537
          %540 = vst [vmem:[#allocation11] sm:$0x3] %v539
        $region60: #{tpu_custom_call.1} parent=31 // pred_fallthru
          _
        // Predicated region
        $region61: #{tpu_custom_call.1} parent=31 // pred_check
          %p541 = pneg %p137
        $region62: #{tpu_custom_call.1} parent=31 // pred_check_branch
          %543 = sbr.rel (%p541) target = $region64
        $region63: #{tpu_custom_call.1} parent=31 // pred_region
          %s545 = ssub.s32 32, 32
          %546 = vsyncadd [#allocation7], %s545
          %s548 = sshll.u32 [#allocation11], 4
          %s549 = int_to_ptr.vmem [resolvable:$true] %s548
          %551 = dma.vmem_to_hbm [thread:$0]  %s549, 32, %s3, [#allocation7]
        $region64: #{tpu_custom_call.1} parent=31 // pred_fallthru
          _
        // Predicated region
        $region65: #{tpu_custom_call.1} parent=31 // pred_check
          %p552 = pneg %p137
        $region66: #{tpu_custom_call.1} parent=31 // pred_check_branch
          %554 = sbr.rel (%p552) target = $region68
        $region67: #{tpu_custom_call.1} parent=31 // pred_region
          %555 = dma.done [#allocation7], 32
        $region68: #{tpu_custom_call.1} parent=31 // pred_fallthru
          _
      $region32: #{tpu_custom_call.1} parent=5 // pred_fallthru
        _
      %p556 = scmp.le.s32.totalorder 2, %s16
      // Predicated region
      $region69: #{tpu_custom_call.1} parent=5 // pred_check
        %p557 = pneg %p556
      $region70: #{tpu_custom_call.1} parent=5 // pred_check_branch
        %559 = sbr.rel (%p557) target = $region72
      $region71: #{tpu_custom_call.1} parent=5 // pred_region
        %s560 = ssub.s32 %s16, 2
      $region72: #{tpu_custom_call.1} parent=5 // pred_fallthru
        _
    $region6: #{tpu_custom_call.1} parent=1 // loop_footer
      %s20 = sadd.s32 1, %s16
    $region7: #{tpu_custom_call.1} parent=1 // loop_footer_branch
      %15 = sbr.rel target = $region3
    $region8: #{tpu_custom_call.1} parent=1 // loop_exit
      _
    %561 = vsyncpa [#allocation6], 1
    %s562 = scalar_lea.sflag [#allocation6], 1
    %563 = vsyncpa %s562, 1
    %564 = vsyncpa [#allocation9], 1
    %s565 = scalar_lea.sflag [#allocation9], 1
    %566 = vsyncpa %s565, 1
    %567 = vsyncpa [#allocation7], 1
    %s568 = scalar_lea.sflag [#allocation7], 1
    %569 = vsyncpa %s568, 1

</llo_original>
